<compile_context>
chip_gen: v7x
topology: tpu7x:2x2x1
jax: 0.10.0
libtpu: 0.0.40
codegen_flags: <defaults>
</compile_context>

<pallas_src>
import jax
import jax.numpy as jnp
from jax.experimental import pallas as pl
from jax.experimental.pallas import tpu as pltpu


# ----------------------------------------------------------------------------- kernels
def agg1_fused_kernel(a_ref, zw_ref, b1_ref, w2_ref, out_ref, acc_ref):
    # Layer-1 GCN aggregation fused with the layer-2 feature transform, K-tiled:
    #   acc += A_hat[rows, kblk] @ zw1[kblk, :]         (f32 accumulate)
    #   on last k:  out = ReLU(acc + b1) @ W2           (bf16 out)
    k = pl.program_id(1)
    tk = a_ref.shape[1]

    @pl.when(k == 0)
    def _():
        acc_ref[...] = jnp.zeros_like(acc_ref)

    start = pl.multiple_of(k * tk, 256)
    acc_ref[...] += jnp.dot(
        a_ref[...], zw_ref[pl.ds(start, tk), :], preferred_element_type=jnp.float32
    )

    @pl.when(k == pl.num_programs(1) - 1)
    def _():
        h1 = jnp.maximum(acc_ref[...] + b1_ref[...], 0.0)
        out_ref[...] = jnp.dot(
            h1.astype(jnp.bfloat16), w2_ref[...], preferred_element_type=jnp.float32
        ).astype(out_ref.dtype)


def agg2_kernel(a_ref, zw_ref, b2_ref, out_ref, acc_ref):
    # Layer-2 GCN aggregation, K-tiled:  out = ReLU(A_hat[rows,:] @ zw2 + b2).
    k = pl.program_id(1)
    tk = a_ref.shape[1]

    @pl.when(k == 0)
    def _():
        acc_ref[...] = jnp.zeros_like(acc_ref)

    start = pl.multiple_of(k * tk, 256)
    acc_ref[...] += jnp.dot(
        a_ref[...], zw_ref[pl.ds(start, tk), :], preferred_element_type=jnp.float32
    )

    @pl.when(k == pl.num_programs(1) - 1)
    def _():
        out_ref[...] = jnp.maximum(acc_ref[...] + b2_ref[...], 0.0).astype(out_ref.dtype)


def pool_head_kernel(pool_ref, h_ref, wn_ref, bias_ref, out_ref, acc_ref):
    # Per-graph mean pool of node embeddings (node-tiled reduction) + linear head.
    # bias_ref already contains aux_pooled @ Wc_aux + lesion @ Wc_les + bc.
    k = pl.program_id(0)

    @pl.when(k == 0)
    def _():
        acc_ref[...] = jnp.zeros_like(acc_ref)

    acc_ref[...] += jnp.dot(pool_ref[...], h_ref[...], preferred_element_type=jnp.float32)

    @pl.when(k == pl.num_programs(0) - 1)
    def _():
        out_ref[...] = (
            jnp.dot(acc_ref[...], wn_ref[...], preferred_element_type=jnp.float32)
            + bias_ref[...]
        )


# ----------------------------------------------------------------------------- helpers
def _round_up(x, m):
    return ((x + m - 1) // m) * m


def _vmem_capacity_bytes():
    try:
        return int(pltpu.get_tpu_info().vmem_capacity_bytes)
    except Exception:
        return 64 * 1024 * 1024  # conservative (v7x per-TensorCore)


def _vmem_limit_bytes(est_bytes):
    # Never request more than the generation's physical per-TC VMEM minus headroom.
    cap = _vmem_capacity_bytes()
    ceiling = max(cap - (8 << 20), 32 << 20)
    return int(min(ceiling, max(32 << 20, est_bytes + (8 << 20))))


def _choose_tiles(n, h_pad):
    """Pick (tm, tk, n_pad): row tile, K tile, padded node count.

    The streamed A_hat panel is (tm, tk), so the per-step footprint is independent
    of N; ZW stays VMEM-resident.  All candidates keep tm | tk | n_pad.
    """
    vmem = _vmem_capacity_bytes()
    budget = int(vmem * 0.75) - (8 << 20)
    n_pad0 = max(256, _round_up(n, 256))
    tk = min(4096, n_pad0)

    # Resident (constant-index-map) operands of the aggregation kernels; count them
    # twice to cover default double-buffering.
    resident = n_pad0 * h_pad * 2 + h_pad * h_pad * 2 + h_pad * 4

    tm = 256
    for cand in (1024, 512, 256):
        if cand > n_pad0 or tk % cand != 0:
            continue
        ws = (
            2 * cand * tk * 2        # double-buffered bf16 A_hat panels
            + 2 * resident           # resident ZW / W2 / bias (double-buffer slack)
            + 2 * cand * h_pad * 2   # double-buffered bf16 output tile
            + cand * h_pad * 4       # f32 accumulator scratch
        )
        if ws <= budget:
            tm = cand
            break

    n_pad = _round_up(max(n, tk), tk)
    # v7x megacore: keep >= 2 tiles on the "parallel" row axis when possible.
    if n_pad // tm < 2 and tm > 128:
        tm = tm // 2
    return tm, tk, n_pad


def _pad2d(x, rows, cols):
    return jnp.pad(x, ((0, rows - x.shape[0]), (0, cols - x.shape[1])))


# ----------------------------------------------------------------------------- pallas wrappers
def _agg1_fused(a_p, zw1_p, b1_p, w2_p, tm, tk):
    n_pad, h_pad = zw1_p.shape
    est = (
        2 * tm * tk * 2
        + 2 * (n_pad * h_pad * 2 + h_pad * h_pad * 2 + h_pad * 4)
        + 2 * tm * h_pad * 2
        + tm * h_pad * 4
    )
    return pl.pallas_call(
        agg1_fused_kernel,
        out_shape=jax.ShapeDtypeStruct((n_pad, h_pad), jnp.bfloat16),
        grid=(n_pad // tm, n_pad // tk),
        in_specs=[
            pl.BlockSpec((tm, tk), lambda i, k: (i, k)),        # streamed A_hat panel
            pl.BlockSpec((n_pad, h_pad), lambda i, k: (0, 0)),  # resident zw1
            pl.BlockSpec((1, h_pad), lambda i, k: (0, 0)),      # resident b1
            pl.BlockSpec((h_pad, h_pad), lambda i, k: (0, 0)),  # resident W2
        ],
        out_specs=pl.BlockSpec((tm, h_pad), lambda i, k: (i, 0)),
        scratch_shapes=[pltpu.VMEM((tm, h_pad), jnp.float32)],
        compiler_params=pltpu.CompilerParams(
            dimension_semantics=("parallel", "arbitrary"),
            vmem_limit_bytes=_vmem_limit_bytes(est),
        ),
    )(a_p, zw1_p, b1_p, w2_p)


def _agg2(a_p, zw2_p, b2_p, tm, tk):
    n_pad, h_pad = zw2_p.shape
    est = (
        2 * tm * tk * 2
        + 2 * (n_pad * h_pad * 2 + h_pad * 4)
        + 2 * tm * h_pad * 2
        + tm * h_pad * 4
    )
    return pl.pallas_call(
        agg2_kernel,
        out_shape=jax.ShapeDtypeStruct((n_pad, h_pad), jnp.bfloat16),
        grid=(n_pad // tm, n_pad // tk),
        in_specs=[
            pl.BlockSpec((tm, tk), lambda i, k: (i, k)),
            pl.BlockSpec((n_pad, h_pad), lambda i, k: (0, 0)),
            pl.BlockSpec((1, h_pad), lambda i, k: (0, 0)),
        ],
        out_specs=pl.BlockSpec((tm, h_pad), lambda i, k: (i, 0)),
        scratch_shapes=[pltpu.VMEM((tm, h_pad), jnp.float32)],
        compiler_params=pltpu.CompilerParams(
            dimension_semantics=("parallel", "arbitrary"),
            vmem_limit_bytes=_vmem_limit_bytes(est),
        ),
    )(a_p, zw2_p, b2_p)


def _pool_head(pool_p, h2_p, wn_p, head_bias_p, tk):
    B, n_pad = pool_p.shape
    h_pad = h2_p.shape[1]
    c_pad = wn_p.shape[1]
    est = (
        2 * B * tk * 2
        + 2 * tk * h_pad * 2
        + 2 * (h_pad * c_pad * 4 + B * c_pad * 4)
        + 2 * B * c_pad * 4
        + B * h_pad * 4
    )
    return pl.pallas_call(
        pool_head_kernel,
        out_shape=jax.ShapeDtypeStruct((B, c_pad), jnp.float32),
        grid=(n_pad // tk,),
        in_specs=[
            pl.BlockSpec((B, tk), lambda k: (0, k)),         # streamed pool slab (bf16)
            pl.BlockSpec((tk, h_pad), lambda k: (k, 0)),     # streamed h2 slab (bf16)
            pl.BlockSpec((h_pad, c_pad), lambda k: (0, 0)),  # resident Wc_node
            pl.BlockSpec((B, c_pad), lambda k: (0, 0)),      # resident folded head bias
        ],
        out_specs=pl.BlockSpec((B, c_pad), lambda k: (0, 0)),
        scratch_shapes=[pltpu.VMEM((B, h_pad), jnp.float32)],
        compiler_params=pltpu.CompilerParams(
            dimension_semantics=("arbitrary",),
            vmem_limit_bytes=_vmem_limit_bytes(est),
        ),
    )(pool_p, h2_p, wn_p, head_bias_p)


# ----------------------------------------------------------------------------- forward
def gnn_classifier_forward(x_gnn, aux, m, v, a_hat, pool, lesion, params):
    N, _ = x_gnn.shape
    B = pool.shape[0]
    H = params["w1"].shape[1]
    C = params["bc"].shape[-1]

    h_pad = max(128, _round_up(H, 128))
    c_pad = max(128, _round_up(C, 128))
    tm, tk, n_pad = _choose_tiles(N, h_pad)

    # ---- XLA glue (tiny, off the hot path) ------------------------------------
    # Exact f32 normalization + layer-1 feature transform (K = f_gnn badly
    # underfills the MXU, so a pallas_call would only add launch overhead).
    x_norm = (x_gnn - m) / v
    zw1 = x_norm @ params["w1"]                                     # [N, H] f32

    # Fold the lane-sparse aux-pool path and the lesion-wide path into one
    # [B, C] head bias (exact).
    aux_pooled = pool @ aux                                         # [B, F_aux]
    head_bias = aux_pooled @ params["wc_aux"] + lesion @ params["wc_les"] + params["bc"]

    # ---- zero-padding (exact; see header comment) ------------------------------
    a_p = _pad2d(a_hat, n_pad, n_pad).astype(jnp.bfloat16)
    zw1_p = _pad2d(zw1, n_pad, h_pad).astype(jnp.bfloat16)
    pool_p = _pad2d(pool, B, n_pad).astype(jnp.bfloat16)
    b1_p = _pad2d(params["b1"], 1, h_pad).astype(jnp.float32)
    b2_p = _pad2d(params["b2"], 1, h_pad).astype(jnp.float32)
    w2_p = _pad2d(params["w2"], h_pad, h_pad).astype(jnp.bfloat16)
    wn_p = _pad2d(params["wc_node"], h_pad, c_pad).astype(jnp.float32)
    hb_p = _pad2d(head_bias, B, c_pad).astype(jnp.float32)

    # ---- layer 1 aggregation + ReLU fused with layer-2 feature transform -------
    zw2 = _agg1_fused(a_p, zw1_p, b1_p, w2_p, tm, tk)               # [n_pad, h_pad] bf16
    # ---- layer 2 aggregation + ReLU ---------------------------------------------
    h2 = _agg2(a_p, zw2, b2_p, tm, tk)                              # [n_pad, h_pad] bf16
    # ---- mean pool + classifier head --------------------------------------------
    logits_pad = _pool_head(pool_p, h2, wn_p, hb_p, tk)             # [B, c_pad] f32
    return logits_pad[:, :C]


# ----------------------------------------------------------------------------- graph glue
def build_adjacency(edge_index, num_nodes):
    """Dense symmetric-normalized adjacency with self loops (GCN style). Glue, not hot path."""
    src, dst = edge_index
    adj = jnp.zeros((num_nodes, num_nodes), jnp.float32)
    adj = adj.at[src, dst].set(1.0)
    adj = adj.at[dst, src].set(1.0)
    eye = jnp.eye(num_nodes, dtype=jnp.float32)
    adj = jnp.where(eye > 0, 1.0, adj)  # self-loops exactly once even if present in edge_index
    deg = adj.sum(axis=1)
    d_inv_sqrt = jax.lax.rsqrt(jnp.maximum(deg, 1e-12))
    return adj * d_inv_sqrt[:, None] * d_inv_sqrt[None, :]


def build_pool_matrix(batch, num_graphs):
    """Mean-pool matrix P[g, n] = 1/|V_g| * [batch[n] == g]. Glue, not hot path."""
    onehot = (batch[None, :] == jnp.arange(num_graphs)[:, None]).astype(jnp.float32)
    counts = jnp.maximum(onehot.sum(axis=1, keepdims=True), 1.0)
    return onehot / counts


def reference_forward(x_gnn, aux, m, v, a_hat, pool, lesion, params):
    x_norm = (x_gnn - m) / v
    h = jnp.maximum(a_hat @ (x_norm @ params["w1"]) + params["b1"], 0.0)
    h = jnp.maximum(a_hat @ (h @ params["w2"]) + params["b2"], 0.0)
    pooled = pool @ h
    aux_pooled = pool @ aux
    return (pooled @ params["wc_node"] + aux_pooled @ params["wc_aux"]
            + lesion @ params["wc_les"] + params["bc"])


if __name__ == "__main__":
    # small, deterministic synthetic problem
    N = 16          # total nodes in the batch
    F_GNN = 8       # cfg.gnn_node_features
    F_AUX = 4       # aux node features (x[:, F_GNN:])
    H = 32          # GCN hidden width
    B = 2           # graphs in the batch
    F_LES = 8       # lesion-wide feature width
    C = 3           # cfg.nb_classes

    key = jax.random.PRNGKey(0)
    keys = jax.random.split(key, 12)

    # batched_data.x : [N, F_GNN + F_AUX]
    x_full = jax.random.normal(keys[0], (N, F_GNN + F_AUX), jnp.float32)
    x_gnn = x_full[:, :F_GNN]
    aux = x_full[:, F_GNN:]

    # cfg.m / cfg.v normalization stats (broadcast over nodes)
    m = jax.random.normal(keys[1], (1, F_GNN), jnp.float32) * 0.1
    v = jnp.abs(jax.random.normal(keys[2], (1, F_GNN), jnp.float32)) + 1.0

    # batched_data.edge_index : ring within each graph of 8 nodes
    src0 = jnp.arange(8)
    edges0 = jnp.stack([src0, (src0 + 1) % 8])
    edge_index = jnp.concatenate([edges0, edges0 + 8], axis=1)
    a_hat = build_adjacency(edge_index, N)

    # batched_data.batch : first 8 nodes -> graph 0, next 8 -> graph 1
    batch = jnp.concatenate([jnp.zeros(8, jnp.int32), jnp.ones(8, jnp.int32)])
    pool = build_pool_matrix(batch, B)

    # batched_data.lesion_wide_feat_tensor : [B, F_LES]
    lesion = jax.random.normal(keys[3], (B, F_LES), jnp.float32)

    # deterministic synthetic parameters (module __init__ injects gnn/pooling submodules)
    params = {
        "w1": jax.random.normal(keys[4], (F_GNN, H), jnp.float32) * 0.2,
        "b1": jax.random.normal(keys[5], (1, H), jnp.float32) * 0.05,
        "w2": jax.random.normal(keys[6], (H, H), jnp.float32) * 0.2,
        "b2": jax.random.normal(keys[7], (1, H), jnp.float32) * 0.05,
        "wc_node": jax.random.normal(keys[8], (H, C), jnp.float32) * 0.2,
        "wc_aux": jax.random.normal(keys[9], (F_AUX, C), jnp.float32) * 0.2,
        "wc_les": jax.random.normal(keys[10], (F_LES, C), jnp.float32) * 0.2,
        "bc": jax.random.normal(keys[11], (1, C), jnp.float32) * 0.05,
    }

    out = gnn_classifier_forward(x_gnn, aux, m, v, a_hat, pool, lesion, params)
    out = jax.block_until_ready(out)

    ref = reference_forward(x_gnn, aux, m, v, a_hat, pool, lesion, params)
    assert out.shape == (B, C)
    # bf16 streaming of A_hat / activations (f32 accumulation) -> compare vs f32 reference
    # with a mixed-precision tolerance.
    assert jnp.allclose(out, ref, atol=5e-2, rtol=5e-2), "Pallas output mismatch vs JAX reference"

    # TODO(synk): prep_predictions (argmax/softmax or sigmoid) is inference-side glue, not kernelized.
    print("KERNEL_OK")
</pallas_src>

<mosaic_0001>
module attributes {stable_mosaic.version = 11 : i64} {
  func.func @agg1_fused_kernel(%arg0: i32, %arg1: i32, %arg2: memref<128x256xbf16, #tpu.memory_space<vmem>>, %arg3: memref<256x128xbf16, #tpu.memory_space<vmem>>, %arg4: memref<1x128xf32, #tpu.memory_space<vmem>>, %arg5: memref<128x128xbf16, #tpu.memory_space<vmem>>, %arg6: memref<128x128xbf16, #tpu.memory_space<vmem>>, %arg7: memref<128x128xf32, #tpu.memory_space<vmem>>) attributes {dimension_semantics = [#tpu.dimension_semantics<parallel>, #tpu.dimension_semantics<arbitrary>], iteration_bounds = array<i64: 2, 1>, scalar_prefetch = 0 : i64, scratch_operands = 1 : i64, tpu.core_type = #tpu.core_type<tc>, window_params = [{transform_indices = @transform_0, window_bounds = array<i64: 128, 256>}, {pipeline_mode = #tpu.pipeline_mode<synchronous>, transform_indices = @transform_1, window_bounds = array<i64: 256, 128>}, {pipeline_mode = #tpu.pipeline_mode<synchronous>, transform_indices = @transform_2, window_bounds = array<i64: 1, 128>}, {pipeline_mode = #tpu.pipeline_mode<synchronous>, transform_indices = @transform_3, window_bounds = array<i64: 128, 128>}, {transform_indices = @transform_4, window_bounds = array<i64: 128, 128>}]} {
    %c0_i32 = arith.constant 0 : i32
    %0 = arith.cmpi eq, %arg1, %c0_i32 : i32
    %1 = arith.extui %0 : i1 to i32
    %c0_i32_0 = arith.constant 0 : i32
    %2 = arith.cmpi ne, %1, %c0_i32_0 : i32
    scf.if %2 {
      %cst_9 = arith.constant 0.000000e+00 : f32
      %15 = vector.broadcast %cst_9 : f32 to vector<128x128xf32>
      %c0_10 = arith.constant 0 : index
      %c0_11 = arith.constant 0 : index
      %16 = vector.load %arg7[%c0_10, %c0_11] : memref<128x128xf32, #tpu.memory_space<vmem>>, vector<128x128xf32>
      tpu.vector_store %arg7[%c0_10, %c0_11], %15 {strides = array<i32>} : memref<128x128xf32, #tpu.memory_space<vmem>>, vector<128x128xf32>,
    } else {
    }
    %c256_i32 = arith.constant 256 : i32
    %3 = arith.muli %arg1, %c256_i32 : i32
    %4 = tpu.assume_multiple %3, 256 : i32
    %c0 = arith.constant 0 : index
    %c0_1 = arith.constant 0 : index
    %5 = vector.load %arg7[%c0, %c0_1] : memref<128x128xf32, #tpu.memory_space<vmem>>, vector<128x128xf32>
    %c0_2 = arith.constant 0 : index
    %c0_3 = arith.constant 0 : index
    %6 = vector.load %arg2[%c0_2, %c0_3] : memref<128x256xbf16, #tpu.memory_space<vmem>>, vector<128x256xbf16>
    %7 = arith.index_cast %4 : i32 to index
    %c0_4 = arith.constant 0 : index
    %8 = vector.load %arg3[%7, %c0_4] : memref<256x128xbf16, #tpu.memory_space<vmem>>, vector<256x128xbf16>
    %cst = arith.constant dense<0.000000e+00> : vector<128x128xf32>
    %9 = tpu.matmul %6, %8, %cst {dimension_numbers = #tpu.dot_dimension_numbers<[1], [0], [0], [1], [0, 0, 1, 1], [], []>} : vector<128x256xbf16>, vector<256x128xbf16>, vector<128x128xf32> -> vector<128x128xf32>
    %10 = arith.addf %5, %9 : vector<128x128xf32>
    %c0_5 = arith.constant 0 : index
    %c0_6 = arith.constant 0 : index
    %11 = vector.load %arg7[%c0_5, %c0_6] : memref<128x128xf32, #tpu.memory_space<vmem>>, vector<128x128xf32>
    tpu.vector_store %arg7[%c0_5, %c0_6], %10 {strides = array<i32>} : memref<128x128xf32, #tpu.memory_space<vmem>>, vector<128x128xf32>,
    %c0_i32_7 = arith.constant 0 : i32
    %12 = arith.cmpi eq, %arg1, %c0_i32_7 : i32
    %13 = arith.extui %12 : i1 to i32
    %c0_i32_8 = arith.constant 0 : i32
    %14 = arith.cmpi ne, %13, %c0_i32_8 : i32
    scf.if %14 {
      %c0_9 = arith.constant 0 : index
      %c0_10 = arith.constant 0 : index
      %15 = vector.load %arg7[%c0_9, %c0_10] : memref<128x128xf32, #tpu.memory_space<vmem>>, vector<128x128xf32>
      %c0_11 = arith.constant 0 : index
      %c0_12 = arith.constant 0 : index
      %16 = vector.load %arg4[%c0_11, %c0_12] : memref<1x128xf32, #tpu.memory_space<vmem>>, vector<1x128xf32>
      %17 = vector.broadcast %16 : vector<1x128xf32> to vector<128x128xf32>
      %18 = arith.addf %15, %17 : vector<128x128xf32>
      %cst_13 = arith.constant 0.000000e+00 : f32
      %19 = vector.broadcast %cst_13 : f32 to vector<128x128xf32>
      %20 = arith.maximumf %18, %19 : vector<128x128xf32>
      %21 = arith.truncf %20 : vector<128x128xf32> to vector<128x128xbf16>
      %c0_14 = arith.constant 0 : index
      %c0_15 = arith.constant 0 : index
      %22 = vector.load %arg5[%c0_14, %c0_15] : memref<128x128xbf16, #tpu.memory_space<vmem>>, vector<128x128xbf16>
      %cst_16 = arith.constant dense<0.000000e+00> : vector<128x128xf32>
      %23 = tpu.matmul %21, %22, %cst_16 {dimension_numbers = #tpu.dot_dimension_numbers<[1], [0], [0], [1], [0, 0, 1, 1], [], []>} : vector<128x128xbf16>, vector<128x128xbf16>, vector<128x128xf32> -> vector<128x128xf32>
      %24 = arith.truncf %23 : vector<128x128xf32> to vector<128x128xbf16>
      %c0_17 = arith.constant 0 : index
      %c0_18 = arith.constant 0 : index
      %25 = vector.load %arg6[%c0_17, %c0_18] : memref<128x128xbf16, #tpu.memory_space<vmem>>, vector<128x128xbf16>
      tpu.vector_store %arg6[%c0_17, %c0_18], %24 {strides = array<i32>} : memref<128x128xbf16, #tpu.memory_space<vmem>>, vector<128x128xbf16>,
    } else {
    }
    return
  }
  func.func @transform_0(%arg0: i32, %arg1: i32) -> (i32, i32) {
    %c0_i32 = arith.constant 0 : i32
    return %arg0, %arg1 : i32, i32
  }
  func.func @transform_1(%arg0: i32, %arg1: i32) -> (i32, i32) {
    %c0_i32 = arith.constant 0 : i32
    %c0_i32_0 = arith.constant 0 : i32
    %c0_i32_1 = arith.constant 0 : i32
    return %c0_i32, %c0_i32_0 : i32, i32
  }
  func.func @transform_2(%arg0: i32, %arg1: i32) -> (i32, i32) {
    %c0_i32 = arith.constant 0 : i32
    %c0_i32_0 = arith.constant 0 : i32
    %c0_i32_1 = arith.constant 0 : i32
    return %c0_i32, %c0_i32_0 : i32, i32
  }
  func.func @transform_3(%arg0: i32, %arg1: i32) -> (i32, i32) {
    %c0_i32 = arith.constant 0 : i32
    %c0_i32_0 = arith.constant 0 : i32
    %c0_i32_1 = arith.constant 0 : i32
    return %c0_i32, %c0_i32_0 : i32, i32
  }
  func.func @transform_4(%arg0: i32, %arg1: i32) -> (i32, i32) {
    %c0_i32 = arith.constant 0 : i32
    %c0_i32_0 = arith.constant 0 : i32
    return %arg0, %c0_i32 : i32, i32
  }
}

</mosaic_0001>

<llo_original>
// kernel: tpu_custom_call.1
$region0: #{tpu_custom_call.1}
  #allocation0 [shape = 'u32[]', space=smem, size = 0x4, offset = 0x4, fixed_abs, tag = 'smem constant byte address 0x4 - core index']
  #allocation1 [shape = 'u32[144,128]{1,0:T(1,128)}', space=vmem, size = 0x12000, scoped, tag = 'internal scratch']
  #allocation2 [shape = 'f32[128,128]{1,0:T(8,128)}', space=vmem, size = 0x10000, scoped, tag = 'scratch operand']
  %s0 = inlined_call_operand.hbm [shape: bf16[256,256], index: 0, kind: input, shape index: {}]
  %s1 = inlined_call_operand.hbm [shape: bf16[256,128], index: 1, kind: input, shape index: {}]
  %s2 = inlined_call_operand.vmem [shape: f32[1,128], index: 2, kind: input, shape index: {}]
  %s3 = inlined_call_operand.hbm [shape: bf16[128,128], index: 3, kind: input, shape index: {}]
  %s4 = inlined_call_operand.hbm [shape: bf16[256,128], index: 4, kind: output, shape index: {}]
  %s5 = sld [smem:[#allocation0]]
  $region69: #{tpu_custom_call.1} parent=0
    _
  %s7 = ssub.s32 1, %s5
  %s8 = scalar_select 0, %s7, %s5
  $region1: #{tpu_custom_call.1} parent=0
    #allocation3 [shape = 'u8[131072]{0}', space=vmem, size = 0x20000, scoped, tag = 'input window, operand 0']
    #allocation4 [shape = 's32[2]{0}', space=sflag, size = 0x8, scoped, tag = 'scoped memory for tpu_custom_call.1']
    #allocation5 [shape = 's32[2]{0}', space=sflag, size = 0x8, scoped, tag = 'scoped memory for tpu_custom_call.1']
    #allocation6 [shape = 'u8[65536]{0}', space=vmem, size = 0x10000, scoped, tag = 'input window, operand 1, single buffered']
    #allocation7 [shape = 's32[1]{0}', space=sflag, size = 0x4, scoped, tag = 'scoped memory for tpu_custom_call.1']
    #allocation8 [shape = 'u8[32768]{0}', space=vmem, size = 0x8000, scoped, tag = 'input window, operand 3, single buffered']
    #allocation9 [shape = 'u8[65536]{0}', space=vmem, size = 0x10000, scoped, tag = 'output window, operand 0']
    %9 = vsyncpa [#allocation4], 0
    %s10 = scalar_lea.sflag [#allocation4], 1
    %11 = vsyncpa %s10, 0
    %12 = vsyncpa [#allocation7], 0
    %13 = vsyncpa [#allocation5], 0
    %s14 = scalar_lea.sflag [#allocation5], 1
    %15 = vsyncpa %s14, 0
    loop: start=0, step=1, limit=4
    $region2: #{tpu_custom_call.1} parent=1 // loop_pre_header
      _
    $region3: #{tpu_custom_call.1} parent=1 // loop_header
      %s17 = sphi 0, %s21
      %p18 = scmp.ge.s32.totalorder %s17, 4
      %s24 = sphi 0, %s36
      %s25 = sphi 0, %s32
      %s26 = sphi 0, %s24
      %s27 = sphi 0, %s25
      %s28 = sphi 0, %s26
      %s29 = sphi 0, %s27
      %s41 = sphi 0, %s43
      %s44 = sphi 0, %s41
      %s45 = sphi 0, %s44
      %s61 = sphi 0, %s45
      %s65 = sphi 0, %s65
      %s67 = sphi 0, %s65
      %s68 = sphi 0, %s67
      %s82 = sphi 0, %s68
      %s86 = sphi 0, %s86
      %s88 = sphi 0, %s86
      %s89 = sphi 0, %s88
      %s103 = sphi 0, %s89
      %s107 = sphi 0, %s107
      %s109 = sphi 0, %s107
      %s110 = sphi 0, %s109
      %s124 = sphi 0, %s110
      %s130 = sphi 0, %s132
      %s133 = sphi 0, %s130
      %s134 = sphi 0, %s133
      %s150 = sphi 0, %s134
    $region4: #{tpu_custom_call.1} parent=1 // loop_header_branch
      %20 = sbr.rel (%p18) target = $region8
    $region5: #{tpu_custom_call.1} parent=1 // loop_body
      %s22 = ssub.s32 %s17, 1
      %s23 = ssub.s32 %s17, 2
      %s30 = sadd.s32 1, %s25
      %p31 = scmp.ge.s32.totalorder %s30, 1
      %s32 = scalar_select %p31, 0, %s30
      %s33 = sadd.s32 1, %s24
      %s34 = scalar_select %p31, %s33, %s24
      %p35 = scmp.ge.s32.totalorder %s34, 2
      %s36 = scalar_select %p35, 0, %s34
      %s37 = ssub.s32 %s24, %s36
      %s38 = ssub.s32 %s25, %s32
      %s39 = sor.u32 %s37, %s38
      %p40 = scmp.eq.s32.totalorder %s39, 0
      %s42 = sadd.s32 %s41, 1
      %s43 = scalar_select %p40, %s41, %s42
      %p46 = pneg %p40
      %p47 = scmp.eq.s32.totalorder %s17, 1
      %p48 = por %p46, %p47
      %p49 = scmp.ne.s32.totalorder %s41, %s44
      %p50 = scmp.eq.s32.totalorder %s17, 0
      %p51 = por %p49, %p50
      %p52 = scmp.ne.s32.totalorder %s41, %s44
      %p53 = scmp.eq.s32.totalorder %s22, 1
      %p54 = por %p52, %p53
      %p55 = scmp.ne.s32.totalorder %s44, %s45
      %p56 = scmp.eq.s32.totalorder %s22, 0
      %p57 = por %p55, %p56
      %p58 = scmp.ne.s32.totalorder %s44, %s45
      %p59 = scmp.eq.s32.totalorder %s23, 1
      %p60 = por %p58, %p59
      %p62 = scmp.ne.s32.totalorder %s45, %s61
      %p63 = scmp.eq.s32.totalorder %s23, 0
      %p64 = por %p62, %p63
      %s66 = sadd.s32 %s65, 1
      %p69 = scmp.eq.s32.totalorder %s17, 1
      %p70 = scmp.ne.s32.totalorder %s65, %s67
      %p71 = scmp.eq.s32.totalorder %s17, 0
      %p72 = por %p70, %p71
      %p73 = scmp.ne.s32.totalorder %s65, %s67
      %p74 = scmp.eq.s32.totalorder %s22, 1
      %p75 = por %p73, %p74
      %p76 = scmp.ne.s32.totalorder %s67, %s68
      %p77 = scmp.eq.s32.totalorder %s22, 0
      %p78 = por %p76, %p77
      %p79 = scmp.ne.s32.totalorder %s67, %s68
      %p80 = scmp.eq.s32.totalorder %s23, 1
      %p81 = por %p79, %p80
      %p83 = scmp.ne.s32.totalorder %s68, %s82
      %p84 = scmp.eq.s32.totalorder %s23, 0
      %p85 = por %p83, %p84
      %s87 = sadd.s32 %s86, 1
      %p90 = scmp.eq.s32.totalorder %s17, 1
      %p91 = scmp.ne.s32.totalorder %s86, %s88
      %p92 = scmp.eq.s32.totalorder %s17, 0
      %p93 = por %p91, %p92
      %p94 = scmp.ne.s32.totalorder %s86, %s88
      %p95 = scmp.eq.s32.totalorder %s22, 1
      %p96 = por %p94, %p95
      %p97 = scmp.ne.s32.totalorder %s88, %s89
      %p98 = scmp.eq.s32.totalorder %s22, 0
      %p99 = por %p97, %p98
      %p100 = scmp.ne.s32.totalorder %s88, %s89
      %p101 = scmp.eq.s32.totalorder %s23, 1
      %p102 = por %p100, %p101
      %p104 = scmp.ne.s32.totalorder %s89, %s103
      %p105 = scmp.eq.s32.totalorder %s23, 0
      %p106 = por %p104, %p105
      %s108 = sadd.s32 %s107, 1
      %p111 = scmp.eq.s32.totalorder %s17, 1
      %p112 = scmp.ne.s32.totalorder %s107, %s109
      %p113 = scmp.eq.s32.totalorder %s17, 0
      %p114 = por %p112, %p113
      %p115 = scmp.ne.s32.totalorder %s107, %s109
      %p116 = scmp.eq.s32.totalorder %s22, 1
      %p117 = por %p115, %p116
      %p118 = scmp.ne.s32.totalorder %s109, %s110
      %p119 = scmp.eq.s32.totalorder %s22, 0
      %p120 = por %p118, %p119
      %p121 = scmp.ne.s32.totalorder %s109, %s110
      %p122 = scmp.eq.s32.totalorder %s23, 1
      %p123 = por %p121, %p122
      %p125 = scmp.ne.s32.totalorder %s110, %s124
      %p126 = scmp.eq.s32.totalorder %s23, 0
      %p127 = por %p125, %p126
      %s128 = ssub.s32 %s24, %s36
      %p129 = scmp.eq.s32.totalorder %s128, 0
      %s131 = sadd.s32 %s130, 1
      %s132 = scalar_select %p129, %s130, %s131
      %p135 = pneg %p129
      %p136 = scmp.eq.s32.totalorder %s17, 1
      %p137 = por %p135, %p136
      %p138 = scmp.ne.s32.totalorder %s130, %s133
      %p139 = scmp.eq.s32.totalorder %s17, 0
      %p140 = por %p138, %p139
      %p141 = scmp.ne.s32.totalorder %s130, %s133
      %p142 = scmp.eq.s32.totalorder %s22, 1
      %p143 = por %p141, %p142
      %p144 = scmp.ne.s32.totalorder %s133, %s134
      %p145 = scmp.eq.s32.totalorder %s22, 0
      %p146 = por %p144, %p145
      %p147 = scmp.ne.s32.totalorder %s133, %s134
      %p148 = scmp.eq.s32.totalorder %s23, 1
      %p149 = por %p147, %p148
      %p151 = scmp.ne.s32.totalorder %s134, %s150
      %p152 = scmp.eq.s32.totalorder %s23, 0
      %p153 = por %p151, %p152
      %p154 = scmp.le.s32.totalorder 1, %s17
      %p155 = scmp.lt.s32.totalorder %s17, 3
      %p156 = pnand %p154, %p155
      %p157 = pneg %p156
      // Predicated region
      $region9: #{tpu_custom_call.1} parent=5 // pred_check
        _
      $region10: #{tpu_custom_call.1} parent=5 // pred_check_branch
        %159 = sbr.rel (%p156) target = $region12
      $region11: #{tpu_custom_call.1} parent=5 // pred_region
        %s160 = ssub.s32 %s17, 1
        // Predicated region
        $region13: #{tpu_custom_call.1} parent=11 // pred_check
          %p161 = pneg %p78
        $region14: #{tpu_custom_call.1} parent=11 // pred_check_branch
          %163 = sbr.rel (%p161) target = $region16
        $region15: #{tpu_custom_call.1} parent=11 // pred_region
          %s165 = ssub.s32 2048, 2048
          %166 = vsyncadd [#allocation7], %s165
          %s167 = sshll.u32 [#allocation6], 4
          %s168 = int_to_ptr.vmem [resolvable:$true] %s167
          %173 = dma.hbm_to_vmem [thread:$0]  %s1, 2048, %s168, [#allocation7], 64, 64, 4
        $region16: #{tpu_custom_call.1} parent=11 // pred_fallthru
          _
        // Predicated region
        $region17: #{tpu_custom_call.1} parent=11 // pred_check
          %p174 = pneg %p99
        $region18: #{tpu_custom_call.1} parent=11 // pred_check_branch
          %176 = sbr.rel (%p174) target = $region20
        $region19: #{tpu_custom_call.1} parent=11 // pred_region
          _
        $region20: #{tpu_custom_call.1} parent=11 // pred_fallthru
          _
        // Predicated region
        $region21: #{tpu_custom_call.1} parent=11 // pred_check
          %p177 = pneg %p120
        $region22: #{tpu_custom_call.1} parent=11 // pred_check_branch
          %179 = sbr.rel (%p177) target = $region24
        $region23: #{tpu_custom_call.1} parent=11 // pred_region
          %s181 = ssub.s32 1024, 1024
          %182 = vsyncadd [#allocation7], %s181
          %s183 = sshll.u32 [#allocation8], 4
          %s184 = int_to_ptr.vmem [resolvable:$true] %s183
          %189 = dma.hbm_to_vmem [thread:$0]  %s3, 1024, %s184, [#allocation7], 64, 64, 4
        $region24: #{tpu_custom_call.1} parent=11 // pred_fallthru
          _
      $region12: #{tpu_custom_call.1} parent=5 // pred_fallthru
        _
      %p190 = scmp.lt.s32.totalorder %s17, 2
      // Predicated region
      $region25: #{tpu_custom_call.1} parent=5 // pred_check
        %p191 = pneg %p190
      $region26: #{tpu_custom_call.1} parent=5 // pred_check_branch
        %193 = sbr.rel (%p191) target = $region28
      $region27: #{tpu_custom_call.1} parent=5 // pred_region
        // Predicated region
        $region29: #{tpu_custom_call.1} parent=27 // pred_check
          %p194 = pneg %p51
        $region30: #{tpu_custom_call.1} parent=27 // pred_check_branch
          %196 = sbr.rel (%p194) target = $region32
        $region31: #{tpu_custom_call.1} parent=27 // pred_region
          %s197 = sand.u32 %s41, 1
          %s198 = scalar_lea.sflag [#allocation4], %s197
          %s199 = sand.u32 %s41, 1
          %s200 = smul.addr %s199, 128
          %s201 = scalar_lea.vmem [#allocation3], %s200
          %s202 = smul.u32 16, %s24
          %s203 = smul.u32 2, %s25
          %s205 = ssub.s32 2048, 2048
          %206 = vsyncadd %s198, %s205
          %s207 = smul.addr %s202, 2
          %s208 = sadd.s32 %s203, %s207
          %s209 = smul.addr %s208, 64
          %s210 = scalar_lea.hbm %s0, %s209
          %s211 = sshll.u32 %s201, 4
          %s212 = int_to_ptr.vmem [resolvable:$true] %s211
          %217 = dma.hbm_to_vmem [thread:$0]  %s210, 2048, %s212, %s198, 128, 128, 8
        $region32: #{tpu_custom_call.1} parent=27 // pred_fallthru
          _
      $region28: #{tpu_custom_call.1} parent=5 // pred_fallthru
        _
      %p218 = scmp.le.s32.totalorder 1, %s17
      %p219 = scmp.lt.s32.totalorder %s17, 3
      %p220 = pnand %p218, %p219
      %p221 = pneg %p220
      // Predicated region
      $region33: #{tpu_custom_call.1} parent=5 // pred_check
        _
      $region34: #{tpu_custom_call.1} parent=5 // pred_check_branch
        %223 = sbr.rel (%p220) target = $region36
      $region35: #{tpu_custom_call.1} parent=5 // pred_region
        %s224 = ssub.s32 %s17, 1
        %s225 = sand.u32 %s44, 1
        %s226 = scalar_lea.sflag [#allocation4], %s225
        %s227 = sand.u32 %s44, 1
        %s228 = smul.addr %s227, 128
        %s229 = scalar_lea.vmem [#allocation3], %s228
        // Predicated region
        $region37: #{tpu_custom_call.1} parent=35 // pred_check
          %p230 = pneg %p57
        $region38: #{tpu_custom_call.1} parent=35 // pred_check_branch
          %232 = sbr.rel (%p230) target = $region40
        $region39: #{tpu_custom_call.1} parent=35 // pred_region
          %233 = dma.done %s226, 2048
        $region40: #{tpu_custom_call.1} parent=35 // pred_fallthru
          _
        // Predicated region
        $region41: #{tpu_custom_call.1} parent=35 // pred_check
          %p234 = pneg %p78
        $region42: #{tpu_custom_call.1} parent=35 // pred_check_branch
          %236 = sbr.rel (%p234) target = $region44
        $region43: #{tpu_custom_call.1} parent=35 // pred_region
          %237 = dma.done [#allocation7], 2048
        $region44: #{tpu_custom_call.1} parent=35 // pred_fallthru
          _
        // Predicated region
        $region45: #{tpu_custom_call.1} parent=35 // pred_check
          %p238 = pneg %p120
        $region46: #{tpu_custom_call.1} parent=35 // pred_check_branch
          %240 = sbr.rel (%p238) target = $region48
        $region47: #{tpu_custom_call.1} parent=35 // pred_region
          %241 = dma.done [#allocation7], 1024
        $region48: #{tpu_custom_call.1} parent=35 // pred_fallthru
          _
        %s242 = sand.u32 %s44, 1
        %s243 = scalar_lea.sflag [#allocation4], %s242
        %s244 = sand.u32 %s44, 1
        %s245 = smul.addr %s244, 128
        %s246 = scalar_lea.vmem [#allocation3], %s245
        %p247 = pneg %p57
        %p248 = pneg %p54
        %p249 = pneg %p78
        %p250 = pneg %p75
        %p251 = pneg %p99
        %p252 = pneg %p96
        %p253 = pneg %p120
        %p254 = pneg %p117
        %p255 = pneg %p146
        %p256 = pneg %p143
        %s257 = sand.u32 %s133, 1
        %s258 = scalar_lea.sflag [#allocation5], %s257
        %s259 = sand.u32 %s133, 1
        %s260 = smul.addr %s259, 64
        %s261 = scalar_lea.vmem [#allocation9], %s260
        %s262 = smul.u32 16, %s26
        %s263 = smul.u32 2, %s27
        %s264 = smul.u32 16, %s26
        %p266 = scmp.eq.s32.totalorder %s27, 0
        // Predicated region
        $region49: #{tpu_custom_call.1} parent=35 // pred_check
          %p267 = pneg %p266
        $region50: #{tpu_custom_call.1} parent=35 // pred_check_branch
          %269 = sbr.rel (%p267) target = $region52
        $region51: #{tpu_custom_call.1} parent=35 // pred_region
          %270 = vst [vmem:[#allocation2] sm:$0xff] 0.0
          %271 = vst [vmem:[#allocation2 + $0x8] sm:$0xff] 0.0
          %272 = vst [vmem:[#allocation2 + $0x10] sm:$0xff] 0.0
          %273 = vst [vmem:[#allocation2 + $0x18] sm:$0xff] 0.0
          %274 = vst [vmem:[#allocation2 + $0x20] sm:$0xff] 0.0
          %275 = vst [vmem:[#allocation2 + $0x28] sm:$0xff] 0.0
          %276 = vst [vmem:[#allocation2 + $0x30] sm:$0xff] 0.0
          %277 = vst [vmem:[#allocation2 + $0x38] sm:$0xff] 0.0
          %278 = vst [vmem:[#allocation2 + $0x40] sm:$0xff] 0.0
          %279 = vst [vmem:[#allocation2 + $0x48] sm:$0xff] 0.0
          %280 = vst [vmem:[#allocation2 + $0x50] sm:$0xff] 0.0
          %281 = vst [vmem:[#allocation2 + $0x58] sm:$0xff] 0.0
          %282 = vst [vmem:[#allocation2 + $0x60] sm:$0xff] 0.0
          %283 = vst [vmem:[#allocation2 + $0x68] sm:$0xff] 0.0
          %284 = vst [vmem:[#allocation2 + $0x70] sm:$0xff] 0.0
          %285 = vst [vmem:[#allocation2 + $0x78] sm:$0xff] 0.0
        $region52: #{tpu_custom_call.1} parent=35 // pred_fallthru
          _
        %s286 = smul.u32 %s27, 256
        %v287 = vld [vmem:[#allocation2] sm:$0xff]
        %v288 = vld [vmem:[#allocation2 + $0x8] sm:$0xff]
        %v289 = vld [vmem:[#allocation2 + $0x10] sm:$0xff]
        %v290 = vld [vmem:[#allocation2 + $0x18] sm:$0xff]
        %v291 = vld [vmem:[#allocation2 + $0x20] sm:$0xff]
        %v292 = vld [vmem:[#allocation2 + $0x28] sm:$0xff]
        %v293 = vld [vmem:[#allocation2 + $0x30] sm:$0xff]
        %v294 = vld [vmem:[#allocation2 + $0x38] sm:$0xff]
        %v295 = vld [vmem:[#allocation2 + $0x40] sm:$0xff]
        %v296 = vld [vmem:[#allocation2 + $0x48] sm:$0xff]
        %v297 = vld [vmem:[#allocation2 + $0x50] sm:$0xff]
        %v298 = vld [vmem:[#allocation2 + $0x58] sm:$0xff]
        %v299 = vld [vmem:[#allocation2 + $0x60] sm:$0xff]
        %v300 = vld [vmem:[#allocation2 + $0x68] sm:$0xff]
        %v301 = vld [vmem:[#allocation2 + $0x70] sm:$0xff]
        %v302 = vld [vmem:[#allocation2 + $0x78] sm:$0xff]
        %v303 = vld [vmem:[%s229] sm:$0xff]
        %v304 = vld [vmem:[%s229 + $0x8] sm:$0xff]
        %v305 = vld [vmem:[%s229 + $0x10] sm:$0xff]
        %v306 = vld [vmem:[%s229 + $0x18] sm:$0xff]
        %v307 = vld [vmem:[%s229 + $0x20] sm:$0xff]
        %v308 = vld [vmem:[%s229 + $0x28] sm:$0xff]
        %v309 = vld [vmem:[%s229 + $0x30] sm:$0xff]
        %v310 = vld [vmem:[%s229 + $0x38] sm:$0xff]
        %v311 = vld [vmem:[%s229 + $0x40] sm:$0xff]
        %v312 = vld [vmem:[%s229 + $0x48] sm:$0xff]
        %v313 = vld [vmem:[%s229 + $0x50] sm:$0xff]
        %v314 = vld [vmem:[%s229 + $0x58] sm:$0xff]
        %v315 = vld [vmem:[%s229 + $0x60] sm:$0xff]
        %v316 = vld [vmem:[%s229 + $0x68] sm:$0xff]
        %v317 = vld [vmem:[%s229 + $0x70] sm:$0xff]
        %v318 = vld [vmem:[%s229 + $0x78] sm:$0xff]
        %s319 = sshra.s32 %s286, 3
        %s320 = sand.u32 %s286, 7
        %s321 = smul.addr %s319, 4
        %s322 = scalar_lea.vmem [#allocation6], %s321
        %v323 = vld [vmem:[%s322] sm:$0xf]
        %v324 = vld [vmem:[%s322 + $0x4] sm:$0xf]
        %v325 = vld [vmem:[%s322 + $0x8] sm:$0xf]
        %v326 = vld [vmem:[%s322 + $0xc] sm:$0xf]
        %v327 = vld [vmem:[%s322 + $0x10] sm:$0xf]
        %v328 = vld [vmem:[%s322 + $0x14] sm:$0xf]
        %v329 = vld [vmem:[%s322 + $0x18] sm:$0xf]
        %v330 = vld [vmem:[%s322 + $0x1c] sm:$0xf]
        %v331 = vld [vmem:[%s322 + $0x20] sm:$0xf]
        %v332 = vld [vmem:[%s322 + $0x24] sm:$0xf]
        %v333 = vld [vmem:[%s322 + $0x28] sm:$0xf]
        %v334 = vld [vmem:[%s322 + $0x2c] sm:$0xf]
        %v335 = vld [vmem:[%s322 + $0x30] sm:$0xf]
        %v336 = vld [vmem:[%s322 + $0x34] sm:$0xf]
        %v337 = vld [vmem:[%s322 + $0x38] sm:$0xf]
        %v338 = vld [vmem:[%s322 + $0x3c] sm:$0xf]
        %v339 = vld [vmem:[%s322 + $0x40] sm:$0xf]
        %v340 = vld [vmem:[%s322 + $0x44] sm:$0xf]
        %v341 = vld [vmem:[%s322 + $0x48] sm:$0xf]
        %v342 = vld [vmem:[%s322 + $0x4c] sm:$0xf]
        %v343 = vld [vmem:[%s322 + $0x50] sm:$0xf]
        %v344 = vld [vmem:[%s322 + $0x54] sm:$0xf]
        %v345 = vld [vmem:[%s322 + $0x58] sm:$0xf]
        %v346 = vld [vmem:[%s322 + $0x5c] sm:$0xf]
        %v347 = vld [vmem:[%s322 + $0x60] sm:$0xf]
        %v348 = vld [vmem:[%s322 + $0x64] sm:$0xf]
        %v349 = vld [vmem:[%s322 + $0x68] sm:$0xf]
        %v350 = vld [vmem:[%s322 + $0x6c] sm:$0xf]
        %v351 = vld [vmem:[%s322 + $0x70] sm:$0xf]
        %v352 = vld [vmem:[%s322 + $0x74] sm:$0xf]
        %v353 = vld [vmem:[%s322 + $0x78] sm:$0xf]
        %v354 = vld [vmem:[%s322 + $0x7c] sm:$0xf]
        %v371 = vunpack.c.l.b16 %v303
        %v372 = vunpack.c.h.b16 %v303
        %v373 = vunpack.c.l.b16 %v304
        %v374 = vunpack.c.h.b16 %v304
        %v375 = vunpack.c.l.b16 %v305
        %v376 = vunpack.c.h.b16 %v305
        %v377 = vunpack.c.l.b16 %v306
        %v378 = vunpack.c.h.b16 %v306
        %v379 = vunpack.c.l.b16 %v307
        %v380 = vunpack.c.h.b16 %v307
        %v381 = vunpack.c.l.b16 %v308
        %v382 = vunpack.c.h.b16 %v308
        %v383 = vunpack.c.l.b16 %v309
        %v384 = vunpack.c.h.b16 %v309
        %v385 = vunpack.c.l.b16 %v310
        %v386 = vunpack.c.h.b16 %v310
        %v387 = vunpack.c.l.b16 %v311
        %v388 = vunpack.c.h.b16 %v311
        %v389 = vunpack.c.l.b16 %v312
        %v390 = vunpack.c.h.b16 %v312
        %v391 = vunpack.c.l.b16 %v313
        %v392 = vunpack.c.h.b16 %v313
        %v393 = vunpack.c.l.b16 %v314
        %v394 = vunpack.c.h.b16 %v314
        %v395 = vunpack.c.l.b16 %v315
        %v396 = vunpack.c.h.b16 %v315
        %v397 = vunpack.c.l.b16 %v316
        %v398 = vunpack.c.h.b16 %v316
        %v399 = vunpack.c.l.b16 %v317
        %v400 = vunpack.c.h.b16 %v317
        %v401 = vunpack.c.l.b16 %v318
        %v402 = vunpack.c.h.b16 %v318
        %v403 = vpack.c.b16 %v373, %v371
        %v404 = vpack.c.b16 %v374, %v372
        %v405 = vpack.c.b16 %v377, %v375
        %v406 = vpack.c.b16 %v378, %v376
        %v407 = vpack.c.b16 %v381, %v379
        %v408 = vpack.c.b16 %v382, %v380
        %v409 = vpack.c.b16 %v385, %v383
        %v410 = vpack.c.b16 %v386, %v384
        %v411 = vpack.c.b16 %v389, %v387
        %v412 = vpack.c.b16 %v390, %v388
        %v413 = vpack.c.b16 %v393, %v391
        %v414 = vpack.c.b16 %v394, %v392
        %v415 = vpack.c.b16 %v397, %v395
        %v416 = vpack.c.b16 %v398, %v396
        %v417 = vpack.c.b16 %v401, %v399
        %v418 = vpack.c.b16 %v402, %v400
        %v467 = vunpack.c.l.b16 %v323
        %v468 = vunpack.c.l.b16 %v324
        %v469 = vunpack.c.l.b16 %v325
        %v470 = vunpack.c.l.b16 %v326
        %v471 = vunpack.c.l.b16 %v327
        %v472 = vunpack.c.l.b16 %v328
        %v473 = vunpack.c.l.b16 %v329
        %v474 = vunpack.c.l.b16 %v330
        %v475 = vunpack.c.l.b16 %v331
        %v476 = vunpack.c.l.b16 %v332
        %v477 = vunpack.c.l.b16 %v333
        %v478 = vunpack.c.l.b16 %v334
        %v479 = vunpack.c.l.b16 %v335
        %v480 = vunpack.c.l.b16 %v336
        %v481 = vunpack.c.l.b16 %v337
        %v482 = vunpack.c.l.b16 %v338
        %v483 = vunpack.c.l.b16 %v339
        %v484 = vunpack.c.l.b16 %v340
        %v485 = vunpack.c.l.b16 %v341
        %v486 = vunpack.c.l.b16 %v342
        %v487 = vunpack.c.l.b16 %v343
        %v488 = vunpack.c.l.b16 %v344
        %v489 = vunpack.c.l.b16 %v345
        %v490 = vunpack.c.l.b16 %v346
        %v491 = vunpack.c.l.b16 %v347
        %v492 = vunpack.c.l.b16 %v348
        %v493 = vunpack.c.l.b16 %v349
        %v494 = vunpack.c.l.b16 %v350
        %v495 = vunpack.c.l.b16 %v351
        %v496 = vunpack.c.l.b16 %v352
        %v497 = vunpack.c.l.b16 %v353
        %v498 = vunpack.c.l.b16 %v354
        %v499 = vpack.c.b16 %v468, %v467
        %v500 = vpack.c.b16 %v470, %v469
        %v501 = vpack.c.b16 %v472, %v471
        %v502 = vpack.c.b16 %v474, %v473
        %v503 = vpack.c.b16 %v476, %v475
        %v504 = vpack.c.b16 %v478, %v477
        %v505 = vpack.c.b16 %v480, %v479
        %v506 = vpack.c.b16 %v482, %v481
        %v507 = vpack.c.b16 %v484, %v483
        %v508 = vpack.c.b16 %v486, %v485
        %v509 = vpack.c.b16 %v488, %v487
        %v510 = vpack.c.b16 %v490, %v489
        %v511 = vpack.c.b16 %v492, %v491
        %v512 = vpack.c.b16 %v494, %v493
        %v513 = vpack.c.b16 %v496, %v495
        %v514 = vpack.c.b16 %v498, %v497
        %531 = vmatprep.subr.bf16.mxu0 0
        %532 = vmatpush1.bf16.msra.mxu0 %v499
        %533 = vmatprep.subr.bf16.mxu0 0
        %534 = vmatpush1.bf16.msra.mxu0 %v500
        %535 = vmatprep.subr.bf16.mxu0 0
        %536 = vmatpush1.bf16.msra.mxu0 %v501
        %537 = vmatprep.subr.bf16.mxu0 0
        %538 = vmatpush1.bf16.msra.mxu0 %v502
        %539 = vmatprep.subr.bf16.mxu0 0
        %540 = vmatpush1.bf16.msra.mxu0 %v503
        %541 = vmatprep.subr.bf16.mxu0 0
        %542 = vmatpush1.bf16.msra.mxu0 %v504
        %543 = vmatprep.subr.bf16.mxu0 0
        %544 = vmatpush1.bf16.msra.mxu0 %v505
        %545 = vmatprep.subr.bf16.mxu0 0
        %546 = vmatpush1.bf16.msra.mxu0 %v506
        %547 = vmatprep.subr.bf16.mxu0 0
        %548 = vmatpush1.bf16.msra.mxu0 %v507
        %549 = vmatprep.subr.bf16.mxu0 0
        %550 = vmatpush1.bf16.msra.mxu0 %v508
        %551 = vmatprep.subr.bf16.mxu0 0
        %552 = vmatpush1.bf16.msra.mxu0 %v509
        %553 = vmatprep.subr.bf16.mxu0 0
        %554 = vmatpush1.bf16.msra.mxu0 %v510
        %555 = vmatprep.subr.bf16.mxu0 0
        %556 = vmatpush1.bf16.msra.mxu0 %v511
        %557 = vmatprep.subr.bf16.mxu0 0
        %558 = vmatpush1.bf16.msra.mxu0 %v512
        %559 = vmatprep.subr.bf16.mxu0 0
        %560 = vmatpush1.bf16.msra.mxu0 %v513
        %561 = vmatprep.subr.bf16.mxu0 0
        %562 = vmatpush1.bf16.msra.mxu0 %v514
        %563 = vmatprep.mubr.bf16.mxu0 %v404
        %564 = vmatmul.mubr.bf16.gmra.mrb[0].mxu0 %v403
        %v565 = vpop.f32.mrb[0].mxu0
        %v566 = vadd.f32 0.0, %v565
        %v567 = vpop.f32.mrb[0].mxu0
        %v568 = vpop.f32.mrb[0].mxu0
        %v569 = vadd.f32 0.0, %v568
        %v570 = vpop.f32.mrb[0].mxu0
        %571 = vmatprep.mubr.bf16.mxu0 %v406
        %572 = vmatmul.mubr.bf16.gmra.mrb[0].mxu0 %v405
        %v573 = vpop.f32.mrb[0].mxu0
        %v574 = vadd.f32 0.0, %v573
        %v575 = vpop.f32.mrb[0].mxu0
        %v576 = vpop.f32.mrb[0].mxu0
        %v577 = vadd.f32 0.0, %v576
        %v578 = vpop.f32.mrb[0].mxu0
        %579 = vmatprep.mubr.bf16.mxu0 %v408
        %580 = vmatmul.mubr.bf16.gmra.mrb[0].mxu0 %v407
        %v581 = vpop.f32.mrb[0].mxu0
        %v582 = vadd.f32 0.0, %v581
        %v583 = vpop.f32.mrb[0].mxu0
        %v584 = vpop.f32.mrb[0].mxu0
        %v585 = vadd.f32 0.0, %v584
        %v586 = vpop.f32.mrb[0].mxu0
        %587 = vmatprep.mubr.bf16.mxu0 %v410
        %588 = vmatmul.mubr.bf16.gmra.mrb[0].mxu0 %v409
        %v589 = vpop.f32.mrb[0].mxu0
        %v590 = vadd.f32 0.0, %v589
        %v591 = vpop.f32.mrb[0].mxu0
        %v592 = vpop.f32.mrb[0].mxu0
        %v593 = vadd.f32 0.0, %v592
        %v594 = vpop.f32.mrb[0].mxu0
        %595 = vmatprep.mubr.bf16.mxu0 %v412
        %596 = vmatmul.mubr.bf16.gmra.mrb[0].mxu0 %v411
        %v597 = vpop.f32.mrb[0].mxu0
        %v598 = vadd.f32 0.0, %v597
        %v599 = vpop.f32.mrb[0].mxu0
        %v600 = vpop.f32.mrb[0].mxu0
        %v601 = vadd.f32 0.0, %v600
        %v602 = vpop.f32.mrb[0].mxu0
        %603 = vmatprep.mubr.bf16.mxu0 %v414
        %604 = vmatmul.mubr.bf16.gmra.mrb[0].mxu0 %v413
        %v605 = vpop.f32.mrb[0].mxu0
        %v606 = vadd.f32 0.0, %v605
        %v607 = vpop.f32.mrb[0].mxu0
        %v608 = vpop.f32.mrb[0].mxu0
        %v609 = vadd.f32 0.0, %v608
        %v610 = vpop.f32.mrb[0].mxu0
        %611 = vmatprep.mubr.bf16.mxu0 %v416
        %612 = vmatmul.mubr.bf16.gmra.mrb[0].mxu0 %v415
        %v613 = vpop.f32.mrb[0].mxu0
        %v614 = vadd.f32 0.0, %v613
        %v615 = vpop.f32.mrb[0].mxu0
        %v616 = vpop.f32.mrb[0].mxu0
        %v617 = vadd.f32 0.0, %v616
        %v618 = vpop.f32.mrb[0].mxu0
        %619 = vmatprep.mubr.bf16.mxu0 %v418
        %620 = vmatmul.mubr.bf16.gmra.mrb[0].mxu0 %v417
        %v621 = vpop.f32.mrb[0].mxu0
        %v622 = vadd.f32 0.0, %v621
        %v623 = vpop.f32.mrb[0].mxu0
        %v624 = vpop.f32.mrb[0].mxu0
        %v625 = vadd.f32 0.0, %v624
        %v626 = vpop.f32.mrb[0].mxu0
        %627 = vdwg.mxu0
        %v628 = vadd.f32 %v287, %v566
        %v629 = vadd.f32 %v288, %v569
        %v630 = vadd.f32 %v289, %v574
        %v631 = vadd.f32 %v290, %v577
        %v632 = vadd.f32 %v291, %v582
        %v633 = vadd.f32 %v292, %v585
        %v634 = vadd.f32 %v293, %v590
        %v635 = vadd.f32 %v294, %v593
        %v636 = vadd.f32 %v295, %v598
        %v637 = vadd.f32 %v296, %v601
        %v638 = vadd.f32 %v297, %v606
        %v639 = vadd.f32 %v298, %v609
        %v640 = vadd.f32 %v299, %v614
        %v641 = vadd.f32 %v300, %v617
        %v642 = vadd.f32 %v301, %v622
        %v643 = vadd.f32 %v302, %v625
        %644 = vst [vmem:[#allocation2] sm:$0xff] %v628
        %645 = vst [vmem:[#allocation2 + $0x8] sm:$0xff] %v629
        %646 = vst [vmem:[#allocation2 + $0x10] sm:$0xff] %v630
        %647 = vst [vmem:[#allocation2 + $0x18] sm:$0xff] %v631
        %648 = vst [vmem:[#allocation2 + $0x20] sm:$0xff] %v632
        %649 = vst [vmem:[#allocation2 + $0x28] sm:$0xff] %v633
        %650 = vst [vmem:[#allocation2 + $0x30] sm:$0xff] %v634
        %651 = vst [vmem:[#allocation2 + $0x38] sm:$0xff] %v635
        %652 = vst [vmem:[#allocation2 + $0x40] sm:$0xff] %v636
        %653 = vst [vmem:[#allocation2 + $0x48] sm:$0xff] %v637
        %654 = vst [vmem:[#allocation2 + $0x50] sm:$0xff] %v638
        %655 = vst [vmem:[#allocation2 + $0x58] sm:$0xff] %v639
        %656 = vst [vmem:[#allocation2 + $0x60] sm:$0xff] %v640
        %657 = vst [vmem:[#allocation2 + $0x68] sm:$0xff] %v641
        %658 = vst [vmem:[#allocation2 + $0x70] sm:$0xff] %v642
        %659 = vst [vmem:[#allocation2 + $0x78] sm:$0xff] %v643
        // Predicated region
        $region53: #{tpu_custom_call.1} parent=35 // pred_check
          %p660 = pneg %p266
        $region54: #{tpu_custom_call.1} parent=35 // pred_check_branch
          %662 = sbr.rel (%p660) target = $region56
        $region55: #{tpu_custom_call.1} parent=35 // pred_region
          %v663 = vld [vmem:[#allocation2] sm:$0xff]
          %v664 = vld [vmem:[#allocation2 + $0x8] sm:$0xff]
          %v665 = vld [vmem:[#allocation2 + $0x10] sm:$0xff]
          %v666 = vld [vmem:[#allocation2 + $0x18] sm:$0xff]
          %v667 = vld [vmem:[#allocation2 + $0x20] sm:$0xff]
          %v668 = vld [vmem:[#allocation2 + $0x28] sm:$0xff]
          %v669 = vld [vmem:[#allocation2 + $0x30] sm:$0xff]
          %v670 = vld [vmem:[#allocation2 + $0x38] sm:$0xff]
          %v671 = vld [vmem:[#allocation2 + $0x40] sm:$0xff]
          %v672 = vld [vmem:[#allocation2 + $0x48] sm:$0xff]
          %v673 = vld [vmem:[#allocation2 + $0x50] sm:$0xff]
          %v674 = vld [vmem:[#allocation2 + $0x58] sm:$0xff]
          %v675 = vld [vmem:[#allocation2 + $0x60] sm:$0xff]
          %v676 = vld [vmem:[#allocation2 + $0x68] sm:$0xff]
          %v677 = vld [vmem:[#allocation2 + $0x70] sm:$0xff]
          %v678 = vld [vmem:[#allocation2 + $0x78] sm:$0xff]
          %v679 = vld [vmem:[%s2] sm:$0x1]
          %v681 = vlaneseq
          %v682 = vshrl.u32 %v681, 7
          %v683 = vsub.s32 0, %v682
          %v684 = vrot.slane %v679, %v683
          %v686 = vadd.f32 %v663, %v684
          %v687 = vadd.f32 %v664, %v684
          %v688 = vadd.f32 %v665, %v684
          %v689 = vadd.f32 %v666, %v684
          %v690 = vadd.f32 %v667, %v684
          %v691 = vadd.f32 %v668, %v684
          %v692 = vadd.f32 %v669, %v684
          %v693 = vadd.f32 %v670, %v684
          %v694 = vadd.f32 %v671, %v684
          %v695 = vadd.f32 %v672, %v684
          %v696 = vadd.f32 %v673, %v684
          %v697 = vadd.f32 %v674, %v684
          %v698 = vadd.f32 %v675, %v684
          %v699 = vadd.f32 %v676, %v684
          %v700 = vadd.f32 %v677, %v684
          %v701 = vadd.f32 %v678, %v684
          %v702 = vmax.f32 %v686, 0.0
          %v703 = vmax.f32 %v687, 0.0
          %v704 = vmax.f32 %v688, 0.0
          %v705 = vmax.f32 %v689, 0.0
          %v706 = vmax.f32 %v690, 0.0
          %v707 = vmax.f32 %v691, 0.0
          %v708 = vmax.f32 %v692, 0.0
          %v709 = vmax.f32 %v693, 0.0
          %v710 = vmax.f32 %v694, 0.0
          %v711 = vmax.f32 %v695, 0.0
          %v712 = vmax.f32 %v696, 0.0
          %v713 = vmax.f32 %v697, 0.0
          %v714 = vmax.f32 %v698, 0.0
          %v715 = vmax.f32 %v699, 0.0
          %v716 = vmax.f32 %v700, 0.0
          %v717 = vmax.f32 %v701, 0.0
          %v718 = vpack.c.bf16 %v703, %v702
          %v719 = vpack.c.bf16 %v705, %v704
          %v720 = vpack.c.bf16 %v707, %v706
          %v721 = vpack.c.bf16 %v709, %v708
          %v722 = vpack.c.bf16 %v711, %v710
          %v723 = vpack.c.bf16 %v713, %v712
          %v724 = vpack.c.bf16 %v715, %v714
          %v725 = vpack.c.bf16 %v717, %v716
          %v726 = vld [vmem:[#allocation8] sm:$0xf]
          %v727 = vld [vmem:[#allocation8 + $0x4] sm:$0xf]
          %v728 = vld [vmem:[#allocation8 + $0x8] sm:$0xf]
          %v729 = vld [vmem:[#allocation8 + $0xc] sm:$0xf]
          %v730 = vld [vmem:[#allocation8 + $0x10] sm:$0xf]
          %v731 = vld [vmem:[#allocation8 + $0x14] sm:$0xf]
          %v732 = vld [vmem:[#allocation8 + $0x18] sm:$0xf]
          %v733 = vld [vmem:[#allocation8 + $0x1c] sm:$0xf]
          %v734 = vld [vmem:[#allocation8 + $0x20] sm:$0xf]
          %v735 = vld [vmem:[#allocation8 + $0x24] sm:$0xf]
          %v736 = vld [vmem:[#allocation8 + $0x28] sm:$0xf]
          %v737 = vld [vmem:[#allocation8 + $0x2c] sm:$0xf]
          %v738 = vld [vmem:[#allocation8 + $0x30] sm:$0xf]
          %v739 = vld [vmem:[#allocation8 + $0x34] sm:$0xf]
          %v740 = vld [vmem:[#allocation8 + $0x38] sm:$0xf]
          %v741 = vld [vmem:[#allocation8 + $0x3c] sm:$0xf]
          %v758 = vunpack.c.l.b16 %v726
          %v759 = vunpack.c.l.b16 %v727
          %v760 = vunpack.c.l.b16 %v728
          %v761 = vunpack.c.l.b16 %v729
          %v762 = vunpack.c.l.b16 %v730
          %v763 = vunpack.c.l.b16 %v731
          %v764 = vunpack.c.l.b16 %v732
          %v765 = vunpack.c.l.b16 %v733
          %v766 = vunpack.c.l.b16 %v734
          %v767 = vunpack.c.l.b16 %v735
          %v768 = vunpack.c.l.b16 %v736
          %v769 = vunpack.c.l.b16 %v737
          %v770 = vunpack.c.l.b16 %v738
          %v771 = vunpack.c.l.b16 %v739
          %v772 = vunpack.c.l.b16 %v740
          %v773 = vunpack.c.l.b16 %v741
          %v774 = vpack.c.b16 %v759, %v758
          %v775 = vpack.c.b16 %v761, %v760
          %v776 = vpack.c.b16 %v763, %v762
          %v777 = vpack.c.b16 %v765, %v764
          %v778 = vpack.c.b16 %v767, %v766
          %v779 = vpack.c.b16 %v769, %v768
          %v780 = vpack.c.b16 %v771, %v770
          %v781 = vpack.c.b16 %v773, %v772
          %790 = vmatprep.subr.bf16.mxu0 0
          %791 = vmatpush1.bf16.msra.mxu0 %v774
          %792 = vmatprep.subr.bf16.mxu0 0
          %793 = vmatpush1.bf16.msra.mxu0 %v775
          %794 = vmatprep.subr.bf16.mxu0 0
          %795 = vmatpush1.bf16.msra.mxu0 %v776
          %796 = vmatprep.subr.bf16.mxu0 0
          %797 = vmatpush1.bf16.msra.mxu0 %v777
          %798 = vmatprep.subr.bf16.mxu0 0
          %799 = vmatpush1.bf16.msra.mxu0 %v778
          %800 = vmatprep.subr.bf16.mxu0 0
          %801 = vmatpush1.bf16.msra.mxu0 %v779
          %802 = vmatprep.subr.bf16.mxu0 0
          %803 = vmatpush1.bf16.msra.mxu0 %v780
          %804 = vmatprep.subr.bf16.mxu0 0
          %805 = vmatpush1.bf16.msra.mxu0 %v781
          %806 = vmatprep.subr.bf16.mxu0 0
          %807 = vmatpush1.bf16.msra.mxu0 0
          %808 = vmatprep.subr.bf16.mxu0 0
          %809 = vmatpush1.bf16.msra.mxu0 0
          %810 = vmatprep.subr.bf16.mxu0 0
          %811 = vmatpush1.bf16.msra.mxu0 0
          %812 = vmatprep.subr.bf16.mxu0 0
          %813 = vmatpush1.bf16.msra.mxu0 0
          %814 = vmatprep.subr.bf16.mxu0 0
          %815 = vmatpush1.bf16.msra.mxu0 0
          %816 = vmatprep.subr.bf16.mxu0 0
          %817 = vmatpush1.bf16.msra.mxu0 0
          %818 = vmatprep.subr.bf16.mxu0 0
          %819 = vmatpush1.bf16.msra.mxu0 0
          %820 = vmatprep.subr.bf16.mxu0 0
          %821 = vmatpush1.bf16.msra.mxu0 0
          %822 = vmatprep.mubr.bf16.mxu0 0
          %823 = vmatmul.mubr.bf16.gmra.mrb[0].mxu0 %v718
          %v824 = vpop.f32.mrb[0].mxu0
          %v825 = vadd.f32 0.0, %v824
          %v826 = vpop.f32.mrb[0].mxu0
          %v827 = vpop.f32.mrb[0].mxu0
          %v828 = vadd.f32 0.0, %v827
          %v829 = vpop.f32.mrb[0].mxu0
          %830 = vmatprep.mubr.bf16.mxu0 0
          %831 = vmatmul.mubr.bf16.gmra.mrb[0].mxu0 %v719
          %v832 = vpop.f32.mrb[0].mxu0
          %v833 = vadd.f32 0.0, %v832
          %v834 = vpop.f32.mrb[0].mxu0
          %v835 = vpop.f32.mrb[0].mxu0
          %v836 = vadd.f32 0.0, %v835
          %v837 = vpop.f32.mrb[0].mxu0
          %838 = vmatprep.mubr.bf16.mxu0 0
          %839 = vmatmul.mubr.bf16.gmra.mrb[0].mxu0 %v720
          %v840 = vpop.f32.mrb[0].mxu0
          %v841 = vadd.f32 0.0, %v840
          %v842 = vpop.f32.mrb[0].mxu0
          %v843 = vpop.f32.mrb[0].mxu0
          %v844 = vadd.f32 0.0, %v843
          %v845 = vpop.f32.mrb[0].mxu0
          %846 = vmatprep.mubr.bf16.mxu0 0
          %847 = vmatmul.mubr.bf16.gmra.mrb[0].mxu0 %v721
          %v848 = vpop.f32.mrb[0].mxu0
          %v849 = vadd.f32 0.0, %v848
          %v850 = vpop.f32.mrb[0].mxu0
          %v851 = vpop.f32.mrb[0].mxu0
          %v852 = vadd.f32 0.0, %v851
          %v853 = vpop.f32.mrb[0].mxu0
          %854 = vmatprep.mubr.bf16.mxu0 0
          %855 = vmatmul.mubr.bf16.gmra.mrb[0].mxu0 %v722
          %v856 = vpop.f32.mrb[0].mxu0
          %v857 = vadd.f32 0.0, %v856
          %v858 = vpop.f32.mrb[0].mxu0
          %v859 = vpop.f32.mrb[0].mxu0
          %v860 = vadd.f32 0.0, %v859
          %v861 = vpop.f32.mrb[0].mxu0
          %862 = vmatprep.mubr.bf16.mxu0 0
          %863 = vmatmul.mubr.bf16.gmra.mrb[0].mxu0 %v723
          %v864 = vpop.f32.mrb[0].mxu0
          %v865 = vadd.f32 0.0, %v864
          %v866 = vpop.f32.mrb[0].mxu0
          %v867 = vpop.f32.mrb[0].mxu0
          %v868 = vadd.f32 0.0, %v867
          %v869 = vpop.f32.mrb[0].mxu0
          %870 = vmatprep.mubr.bf16.mxu0 0
          %871 = vmatmul.mubr.bf16.gmra.mrb[0].mxu0 %v724
          %v872 = vpop.f32.mrb[0].mxu0
          %v873 = vadd.f32 0.0, %v872
          %v874 = vpop.f32.mrb[0].mxu0
          %v875 = vpop.f32.mrb[0].mxu0
          %v876 = vadd.f32 0.0, %v875
          %v877 = vpop.f32.mrb[0].mxu0
          %878 = vmatprep.mubr.bf16.mxu0 0
          %879 = vmatmul.mubr.bf16.gmra.mrb[0].mxu0 %v725
          %v880 = vpop.f32.mrb[0].mxu0
          %v881 = vadd.f32 0.0, %v880
          %v882 = vpop.f32.mrb[0].mxu0
          %v883 = vpop.f32.mrb[0].mxu0
          %v884 = vadd.f32 0.0, %v883
          %v885 = vpop.f32.mrb[0].mxu0
          %886 = vdwg.mxu0
          %v887 = vpack.c.bf16 %v828, %v825
          %v888 = vpack.c.bf16 %v836, %v833
          %v889 = vpack.c.bf16 %v844, %v841
          %v890 = vpack.c.bf16 %v852, %v849
          %v891 = vpack.c.bf16 %v860, %v857
          %v892 = vpack.c.bf16 %v868, %v865
          %v893 = vpack.c.bf16 %v876, %v873
          %v894 = vpack.c.bf16 %v884, %v881
          %v903 = vunpack.c.l.b16 %v887
          %v904 = vunpack.c.h.b16 %v887
          %v905 = vunpack.c.l.b16 %v888
          %v906 = vunpack.c.h.b16 %v888
          %v907 = vunpack.c.l.b16 %v889
          %v908 = vunpack.c.h.b16 %v889
          %v909 = vunpack.c.l.b16 %v890
          %v910 = vunpack.c.h.b16 %v890
          %v911 = vunpack.c.l.b16 %v891
          %v912 = vunpack.c.h.b16 %v891
          %v913 = vunpack.c.l.b16 %v892
          %v914 = vunpack.c.h.b16 %v892
          %v915 = vunpack.c.l.b16 %v893
          %v916 = vunpack.c.h.b16 %v893
          %v917 = vunpack.c.l.b16 %v894
          %v918 = vunpack.c.h.b16 %v894
          %v919 = vpack.c.b16 %v903, %v903
          %v920 = vpack.c.b16 %v904, %v904
          %v921 = vpack.c.b16 %v905, %v905
          %v922 = vpack.c.b16 %v906, %v906
          %v923 = vpack.c.b16 %v907, %v907
          %v924 = vpack.c.b16 %v908, %v908
          %v925 = vpack.c.b16 %v909, %v909
          %v926 = vpack.c.b16 %v910, %v910
          %v927 = vpack.c.b16 %v911, %v911
          %v928 = vpack.c.b16 %v912, %v912
          %v929 = vpack.c.b16 %v913, %v913
          %v930 = vpack.c.b16 %v914, %v914
          %v931 = vpack.c.b16 %v915, %v915
          %v932 = vpack.c.b16 %v916, %v916
          %v933 = vpack.c.b16 %v917, %v917
          %v934 = vpack.c.b16 %v918, %v918
          %951 = vst [vmem:[%s261] sm:$0xf] %v919
          %952 = vst [vmem:[%s261 + $0x4] sm:$0xf] %v920
          %953 = vst [vmem:[%s261 + $0x8] sm:$0xf] %v921
          %954 = vst [vmem:[%s261 + $0xc] sm:$0xf] %v922
          %955 = vst [vmem:[%s261 + $0x10] sm:$0xf] %v923
          %956 = vst [vmem:[%s261 + $0x14] sm:$0xf] %v924
          %957 = vst [vmem:[%s261 + $0x18] sm:$0xf] %v925
          %958 = vst [vmem:[%s261 + $0x1c] sm:$0xf] %v926
          %959 = vst [vmem:[%s261 + $0x20] sm:$0xf] %v927
          %960 = vst [vmem:[%s261 + $0x24] sm:$0xf] %v928
          %961 = vst [vmem:[%s261 + $0x28] sm:$0xf] %v929
          %962 = vst [vmem:[%s261 + $0x2c] sm:$0xf] %v930
          %963 = vst [vmem:[%s261 + $0x30] sm:$0xf] %v931
          %964 = vst [vmem:[%s261 + $0x34] sm:$0xf] %v932
          %965 = vst [vmem:[%s261 + $0x38] sm:$0xf] %v933
          %966 = vst [vmem:[%s261 + $0x3c] sm:$0xf] %v934
        $region56: #{tpu_custom_call.1} parent=35 // pred_fallthru
          _
        %s967 = sand.u32 %s133, 1
        %s968 = scalar_lea.sflag [#allocation5], %s967
        %s969 = sand.u32 %s133, 1
        %s970 = smul.addr %s969, 64
        %s971 = scalar_lea.vmem [#allocation9], %s970
        // Predicated region
        $region57: #{tpu_custom_call.1} parent=35 // pred_check
          %p972 = pneg %p143
        $region58: #{tpu_custom_call.1} parent=35 // pred_check_branch
          %974 = sbr.rel (%p972) target = $region60
        $region59: #{tpu_custom_call.1} parent=35 // pred_region
          %s975 = smul.u32 16, %s26
          %s977 = ssub.s32 1024, 1024
          %978 = vsyncadd %s968, %s977
          %s979 = smul.addr %s975, 64
          %s980 = scalar_lea.hbm %s4, %s979
          %s981 = sshll.u32 %s971, 4
          %s982 = int_to_ptr.vmem [resolvable:$true] %s981
          %987 = dma.vmem_to_hbm [thread:$0]  %s982, 1024, %s980, %s968, 64, 64, 4
        $region60: #{tpu_custom_call.1} parent=35 // pred_fallthru
          _
      $region36: #{tpu_custom_call.1} parent=5 // pred_fallthru
        _
      %p988 = scmp.le.s32.totalorder 2, %s17
      // Predicated region
      $region61: #{tpu_custom_call.1} parent=5 // pred_check
        %p989 = pneg %p988
      $region62: #{tpu_custom_call.1} parent=5 // pred_check_branch
        %991 = sbr.rel (%p989) target = $region64
      $region63: #{tpu_custom_call.1} parent=5 // pred_region
        %s992 = ssub.s32 %s17, 2
        // Predicated region
        $region65: #{tpu_custom_call.1} parent=63 // pred_check
          %p993 = pneg %p149
        $region66: #{tpu_custom_call.1} parent=63 // pred_check_branch
          %995 = sbr.rel (%p993) target = $region68
        $region67: #{tpu_custom_call.1} parent=63 // pred_region
          %s996 = sand.u32 %s134, 1
          %s997 = scalar_lea.sflag [#allocation5], %s996
          %s998 = sand.u32 %s134, 1
          %s999 = smul.addr %s998, 64
          %s1000 = scalar_lea.vmem [#allocation9], %s999
          %1001 = dma.done %s997, 1024
        $region68: #{tpu_custom_call.1} parent=63 // pred_fallthru
          _
      $region64: #{tpu_custom_call.1} parent=5 // pred_fallthru
        _
    $region6: #{tpu_custom_call.1} parent=1 // loop_footer
      %s21 = sadd.s32 1, %s17
    $region7: #{tpu_custom_call.1} parent=1 // loop_footer_branch
      %16 = sbr.rel target = $region3
    $region8: #{tpu_custom_call.1} parent=1 // loop_exit
      _
    %1002 = vsyncpa [#allocation4], 1
    %s1003 = scalar_lea.sflag [#allocation4], 1
    %1004 = vsyncpa %s1003, 1
    %1005 = vsyncpa [#allocation7], 1
    %1006 = vsyncpa [#allocation5], 1
    %s1007 = scalar_lea.sflag [#allocation5], 1
    %1008 = vsyncpa %s1007, 1

</llo_original>
